<compile_context>
chip_gen: v6e
topology: v6e:2x2x1
jax: 0.10.0
libtpu: 0.0.40
codegen_flags: <defaults>
</compile_context>

<pallas_src>
import jax
import jax.numpy as jnp
from jax.experimental import pallas as pl
from jax.experimental.pallas import tpu as pltpu

LAYER_DIMS = [75, 128, 256, 256, 128, 75, 1]
FEAT_PAD = 128          # 75 -> 128 lane padding
TB_MAX = 256            # batch tile (fills MXU M dim, amortizes step overhead)


def _round_up(n, m):
    return (n + m - 1) // m * m


def _sigmoid(y):
    # exp and reciprocal both go to the EUP slot; approx recip is ~free.
    return pl.reciprocal(1.0 + jnp.exp(-y), approx=True)


def _discriminator_kernel(x_ref,
                          w1, b1, w2, b2, w3, b3, w4, b4, w5, b5, w6, b6,
                          o_ref):
    # x tile: (TB, 128) f32 (features zero-padded 75->128)
    h = x_ref[...]

    def layer(h, w_ref, b_ref):
        # bf16 operands on the MXU, f32 accumulation; bias+sigmoid in f32.
        y = jnp.dot(h.astype(jnp.bfloat16), w_ref[...],
                    preferred_element_type=jnp.float32)
        return _sigmoid(y + b_ref[...])

    h = layer(h, w1, b1)   # (TB, 128)
    h = layer(h, w2, b2)   # (TB, 256)
    h = layer(h, w3, b3)   # (TB, 256)
    h = layer(h, w4, b4)   # (TB, 128)
    h = layer(h, w5, b5)   # (TB, 128)  (75 real cols + zero-weight pad cols)

    # Final (128)->1 layer as a lane reduction instead of an N=1 matmul.
    # Padded rows of w6 are zero, so the 0.5-valued pad columns of h contribute 0.
    logit = jnp.sum(h * w6[...], axis=-1, keepdims=True) + b6[...]
    o_ref[...] = _sigmoid(logit).astype(o_ref.dtype)


def prepare_params(params):
    """Pad odd feature dims to 128 lanes, transpose the last layer into a row
    vector, and cast matmul weights to bf16 (biases stay f32)."""
    (w1, b1), (w2, b2), (w3, b3), (w4, b4), (w5, b5), (w6, b6) = params
    pad = FEAT_PAD - LAYER_DIMS[0]                                   # 53
    w1p = jnp.pad(w1, ((0, pad), (0, 0))).astype(jnp.bfloat16)       # (128, 128)
    w5p = jnp.pad(w5, ((0, 0), (0, pad))).astype(jnp.bfloat16)       # (128, 128)
    b5p = jnp.pad(b5, ((0, 0), (0, pad)))                            # (1, 128) f32
    w6row = jnp.pad(w6, ((0, pad), (0, 0))).T                        # (1, 128) f32
    return [
        (w1p, b1),
        (w2.astype(jnp.bfloat16), b2),
        (w3.astype(jnp.bfloat16), b3),
        (w4.astype(jnp.bfloat16), b4),
        (w5p, b5p),
        (w6row, b6),
    ]


def discriminator_forward(x, params, *, tb_max=TB_MAX):
    """x: (B, 75) float32; params: list of (W (in,out) f32, b (1,out) f32)."""
    B, F = x.shape
    assert F == LAYER_DIMS[0]
    prepped = prepare_params(params)

    # Batch tile: multiple of 8 (f32 sublane), capped at TB_MAX.
    tb = min(tb_max, _round_up(B, 8))
    Bp = _round_up(B, tb)

    # Zero-pad features 75->128 and batch to a multiple of the tile.
    x_pad = jnp.pad(x, ((0, Bp - B), (0, FEAT_PAD - F)))

    in_specs = [pl.BlockSpec((tb, FEAT_PAD), lambda i: (i, 0))]
    flat_params = []
    for (w, b) in prepped:
        # Constant index_map -> weights/biases stay VMEM-resident across tiles.
        in_specs.append(pl.BlockSpec(w.shape, lambda i: (0, 0)))
        in_specs.append(pl.BlockSpec(b.shape, lambda i: (0, 0)))
        flat_params.extend([w, b])

    out = pl.pallas_call(
        _discriminator_kernel,
        out_shape=jax.ShapeDtypeStruct((Bp, 1), jnp.float32),
        grid_spec=pltpu.PrefetchScalarGridSpec(
            num_scalar_prefetch=0,
            grid=(Bp // tb,),
            in_specs=in_specs,
            out_specs=pl.BlockSpec((tb, 1), lambda i: (i, 0)),
        ),
        compiler_params=pltpu.CompilerParams(
            dimension_semantics=("parallel",)),
    )(x_pad, *flat_params)

    return out[:B]


def init_params(key):
    """Deterministic init mimicking nn.Linear's uniform(-1/sqrt(fan_in), ...)."""
    params = []
    for i in range(len(LAYER_DIMS) - 1):
        fan_in, fan_out = LAYER_DIMS[i], LAYER_DIMS[i + 1]
        key, kw, kb = jax.random.split(key, 3)
        bound = 1.0 / jnp.sqrt(fan_in)
        w = jax.random.uniform(kw, (fan_in, fan_out), jnp.float32, -bound, bound)
        b = jax.random.uniform(kb, (1, fan_out), jnp.float32, -bound, bound)
        params.append((w, b))
    return params


def reference_forward(x, params):
    h = x
    for (w, b) in params:
        h = jax.nn.sigmoid(h @ w + b)
    return h


if __name__ == "__main__":
    key = jax.random.PRNGKey(0)
    key, kx = jax.random.split(key)

    B = 8
    x = jax.random.normal(kx, (B, 75), jnp.float32)
    params = init_params(key)

    out = discriminator_forward(x, params)
    out = jax.block_until_ready(out)

    ref = reference_forward(x, params)
    assert out.shape == (B, 1), out.shape
    # bf16 matmul operands + approx reciprocal -> relaxed tolerance vs f32 ref.
    max_err = jnp.max(jnp.abs(out - ref))
    assert jnp.allclose(out, ref, atol=2e-2, rtol=0.0), f"max abs err {max_err}"

    print("KERNEL_OK")
</pallas_src>

<mosaic_0001>
module attributes {stable_mosaic.version = 11 : i64} {
  func.func @_discriminator_kernel(%arg0: i32, %arg1: memref<8x128xf32, #tpu.memory_space<vmem>>, %arg2: memref<128x128xbf16, #tpu.memory_space<vmem>>, %arg3: memref<1x128xf32, #tpu.memory_space<vmem>>, %arg4: memref<128x256xbf16, #tpu.memory_space<vmem>>, %arg5: memref<1x256xf32, #tpu.memory_space<vmem>>, %arg6: memref<256x256xbf16, #tpu.memory_space<vmem>>, %arg7: memref<1x256xf32, #tpu.memory_space<vmem>>, %arg8: memref<256x128xbf16, #tpu.memory_space<vmem>>, %arg9: memref<1x128xf32, #tpu.memory_space<vmem>>, %arg10: memref<128x128xbf16, #tpu.memory_space<vmem>>, %arg11: memref<1x128xf32, #tpu.memory_space<vmem>>, %arg12: memref<1x128xf32, #tpu.memory_space<vmem>>, %arg13: memref<1x1xf32, #tpu.memory_space<vmem>>, %arg14: memref<8x1xf32, #tpu.memory_space<vmem>>) attributes {dimension_semantics = [#tpu.dimension_semantics<parallel>], iteration_bounds = array<i64: 1>, scalar_prefetch = 0 : i64, scratch_operands = 0 : i64, tpu.core_type = #tpu.core_type<tc>, window_params = [{transform_indices = @transform_0, window_bounds = array<i64: 8, 128>}, {pipeline_mode = #tpu.pipeline_mode<synchronous>, transform_indices = @transform_1, window_bounds = array<i64: 128, 128>}, {pipeline_mode = #tpu.pipeline_mode<synchronous>, transform_indices = @transform_2, window_bounds = array<i64: 1, 128>}, {pipeline_mode = #tpu.pipeline_mode<synchronous>, transform_indices = @transform_3, window_bounds = array<i64: 128, 256>}, {pipeline_mode = #tpu.pipeline_mode<synchronous>, transform_indices = @transform_4, window_bounds = array<i64: 1, 256>}, {pipeline_mode = #tpu.pipeline_mode<synchronous>, transform_indices = @transform_5, window_bounds = array<i64: 256, 256>}, {pipeline_mode = #tpu.pipeline_mode<synchronous>, transform_indices = @transform_6, window_bounds = array<i64: 1, 256>}, {pipeline_mode = #tpu.pipeline_mode<synchronous>, transform_indices = @transform_7, window_bounds = array<i64: 256, 128>}, {pipeline_mode = #tpu.pipeline_mode<synchronous>, transform_indices = @transform_8, window_bounds = array<i64: 1, 128>}, {pipeline_mode = #tpu.pipeline_mode<synchronous>, transform_indices = @transform_9, window_bounds = array<i64: 128, 128>}, {pipeline_mode = #tpu.pipeline_mode<synchronous>, transform_indices = @transform_10, window_bounds = array<i64: 1, 128>}, {pipeline_mode = #tpu.pipeline_mode<synchronous>, transform_indices = @transform_11, window_bounds = array<i64: 1, 128>}, {pipeline_mode = #tpu.pipeline_mode<synchronous>, transform_indices = @transform_12, window_bounds = array<i64: 1, 1>}, {transform_indices = @transform_13, window_bounds = array<i64: 8, 1>}]} {
    %c0 = arith.constant 0 : index
    %c0_0 = arith.constant 0 : index
    %0 = vector.load %arg1[%c0, %c0_0] : memref<8x128xf32, #tpu.memory_space<vmem>>, vector<8x128xf32>
    %1 = arith.truncf %0 : vector<8x128xf32> to vector<8x128xbf16>
    %c0_1 = arith.constant 0 : index
    %c0_2 = arith.constant 0 : index
    %2 = vector.load %arg2[%c0_1, %c0_2] : memref<128x128xbf16, #tpu.memory_space<vmem>>, vector<128x128xbf16>
    %cst = arith.constant dense<0.000000e+00> : vector<8x128xf32>
    %3 = tpu.matmul %1, %2, %cst {dimension_numbers = #tpu.dot_dimension_numbers<[1], [0], [0], [1], [0, 0, 1, 1], [], []>} : vector<8x128xbf16>, vector<128x128xbf16>, vector<8x128xf32> -> vector<8x128xf32>
    %c0_3 = arith.constant 0 : index
    %c0_4 = arith.constant 0 : index
    %4 = vector.load %arg3[%c0_3, %c0_4] : memref<1x128xf32, #tpu.memory_space<vmem>>, vector<1x128xf32>
    %5 = vector.broadcast %4 : vector<1x128xf32> to vector<8x128xf32>
    %6 = arith.addf %3, %5 : vector<8x128xf32>
    %cst_5 = arith.constant 0.000000e+00 : f32
    %7 = vector.broadcast %cst_5 : f32 to vector<8x128xf32>
    %8 = arith.subf %7, %6 : vector<8x128xf32>
    %9 = math.exp %8 : vector<8x128xf32>
    %cst_6 = arith.constant 1.000000e+00 : f32
    %10 = vector.broadcast %cst_6 : f32 to vector<8x128xf32>
    %11 = arith.addf %10, %9 : vector<8x128xf32>
    %12 = tpu.reciprocal %11 {approx = true} : vector<8x128xf32> -> vector<8x128xf32>
    %13 = arith.truncf %12 : vector<8x128xf32> to vector<8x128xbf16>
    %c0_7 = arith.constant 0 : index
    %c0_8 = arith.constant 0 : index
    %14 = vector.load %arg4[%c0_7, %c0_8] : memref<128x256xbf16, #tpu.memory_space<vmem>>, vector<128x256xbf16>
    %cst_9 = arith.constant dense<0.000000e+00> : vector<8x256xf32>
    %15 = tpu.matmul %13, %14, %cst_9 {dimension_numbers = #tpu.dot_dimension_numbers<[1], [0], [0], [1], [0, 0, 1, 1], [], []>} : vector<8x128xbf16>, vector<128x256xbf16>, vector<8x256xf32> -> vector<8x256xf32>
    %c0_10 = arith.constant 0 : index
    %c0_11 = arith.constant 0 : index
    %16 = vector.load %arg5[%c0_10, %c0_11] : memref<1x256xf32, #tpu.memory_space<vmem>>, vector<1x256xf32>
    %17 = vector.broadcast %16 : vector<1x256xf32> to vector<8x256xf32>
    %18 = arith.addf %15, %17 : vector<8x256xf32>
    %cst_12 = arith.constant 0.000000e+00 : f32
    %19 = vector.broadcast %cst_12 : f32 to vector<8x256xf32>
    %20 = arith.subf %19, %18 : vector<8x256xf32>
    %21 = math.exp %20 : vector<8x256xf32>
    %cst_13 = arith.constant 1.000000e+00 : f32
    %22 = vector.broadcast %cst_13 : f32 to vector<8x256xf32>
    %23 = arith.addf %22, %21 : vector<8x256xf32>
    %24 = tpu.reciprocal %23 {approx = true} : vector<8x256xf32> -> vector<8x256xf32>
    %25 = arith.truncf %24 : vector<8x256xf32> to vector<8x256xbf16>
    %c0_14 = arith.constant 0 : index
    %c0_15 = arith.constant 0 : index
    %26 = vector.load %arg6[%c0_14, %c0_15] : memref<256x256xbf16, #tpu.memory_space<vmem>>, vector<256x256xbf16>
    %cst_16 = arith.constant dense<0.000000e+00> : vector<8x256xf32>
    %27 = tpu.matmul %25, %26, %cst_16 {dimension_numbers = #tpu.dot_dimension_numbers<[1], [0], [0], [1], [0, 0, 1, 1], [], []>} : vector<8x256xbf16>, vector<256x256xbf16>, vector<8x256xf32> -> vector<8x256xf32>
    %c0_17 = arith.constant 0 : index
    %c0_18 = arith.constant 0 : index
    %28 = vector.load %arg7[%c0_17, %c0_18] : memref<1x256xf32, #tpu.memory_space<vmem>>, vector<1x256xf32>
    %29 = vector.broadcast %28 : vector<1x256xf32> to vector<8x256xf32>
    %30 = arith.addf %27, %29 : vector<8x256xf32>
    %cst_19 = arith.constant 0.000000e+00 : f32
    %31 = vector.broadcast %cst_19 : f32 to vector<8x256xf32>
    %32 = arith.subf %31, %30 : vector<8x256xf32>
    %33 = math.exp %32 : vector<8x256xf32>
    %cst_20 = arith.constant 1.000000e+00 : f32
    %34 = vector.broadcast %cst_20 : f32 to vector<8x256xf32>
    %35 = arith.addf %34, %33 : vector<8x256xf32>
    %36 = tpu.reciprocal %35 {approx = true} : vector<8x256xf32> -> vector<8x256xf32>
    %37 = arith.truncf %36 : vector<8x256xf32> to vector<8x256xbf16>
    %c0_21 = arith.constant 0 : index
    %c0_22 = arith.constant 0 : index
    %38 = vector.load %arg8[%c0_21, %c0_22] : memref<256x128xbf16, #tpu.memory_space<vmem>>, vector<256x128xbf16>
    %cst_23 = arith.constant dense<0.000000e+00> : vector<8x128xf32>
    %39 = tpu.matmul %37, %38, %cst_23 {dimension_numbers = #tpu.dot_dimension_numbers<[1], [0], [0], [1], [0, 0, 1, 1], [], []>} : vector<8x256xbf16>, vector<256x128xbf16>, vector<8x128xf32> -> vector<8x128xf32>
    %c0_24 = arith.constant 0 : index
    %c0_25 = arith.constant 0 : index
    %40 = vector.load %arg9[%c0_24, %c0_25] : memref<1x128xf32, #tpu.memory_space<vmem>>, vector<1x128xf32>
    %41 = vector.broadcast %40 : vector<1x128xf32> to vector<8x128xf32>
    %42 = arith.addf %39, %41 : vector<8x128xf32>
    %cst_26 = arith.constant 0.000000e+00 : f32
    %43 = vector.broadcast %cst_26 : f32 to vector<8x128xf32>
    %44 = arith.subf %43, %42 : vector<8x128xf32>
    %45 = math.exp %44 : vector<8x128xf32>
    %cst_27 = arith.constant 1.000000e+00 : f32
    %46 = vector.broadcast %cst_27 : f32 to vector<8x128xf32>
    %47 = arith.addf %46, %45 : vector<8x128xf32>
    %48 = tpu.reciprocal %47 {approx = true} : vector<8x128xf32> -> vector<8x128xf32>
    %49 = arith.truncf %48 : vector<8x128xf32> to vector<8x128xbf16>
    %c0_28 = arith.constant 0 : index
    %c0_29 = arith.constant 0 : index
    %50 = vector.load %arg10[%c0_28, %c0_29] : memref<128x128xbf16, #tpu.memory_space<vmem>>, vector<128x128xbf16>
    %cst_30 = arith.constant dense<0.000000e+00> : vector<8x128xf32>
    %51 = tpu.matmul %49, %50, %cst_30 {dimension_numbers = #tpu.dot_dimension_numbers<[1], [0], [0], [1], [0, 0, 1, 1], [], []>} : vector<8x128xbf16>, vector<128x128xbf16>, vector<8x128xf32> -> vector<8x128xf32>
    %c0_31 = arith.constant 0 : index
    %c0_32 = arith.constant 0 : index
    %52 = vector.load %arg11[%c0_31, %c0_32] : memref<1x128xf32, #tpu.memory_space<vmem>>, vector<1x128xf32>
    %53 = vector.broadcast %52 : vector<1x128xf32> to vector<8x128xf32>
    %54 = arith.addf %51, %53 : vector<8x128xf32>
    %cst_33 = arith.constant 0.000000e+00 : f32
    %55 = vector.broadcast %cst_33 : f32 to vector<8x128xf32>
    %56 = arith.subf %55, %54 : vector<8x128xf32>
    %57 = math.exp %56 : vector<8x128xf32>
    %cst_34 = arith.constant 1.000000e+00 : f32
    %58 = vector.broadcast %cst_34 : f32 to vector<8x128xf32>
    %59 = arith.addf %58, %57 : vector<8x128xf32>
    %60 = tpu.reciprocal %59 {approx = true} : vector<8x128xf32> -> vector<8x128xf32>
    %c0_35 = arith.constant 0 : index
    %c0_36 = arith.constant 0 : index
    %61 = vector.load %arg12[%c0_35, %c0_36] : memref<1x128xf32, #tpu.memory_space<vmem>>, vector<1x128xf32>
    %62 = vector.broadcast %61 : vector<1x128xf32> to vector<8x128xf32>
    %63 = arith.mulf %60, %62 : vector<8x128xf32>
    %cst_37 = arith.constant dense<0.000000e+00> : vector<8xf32>
    %64 = vector.multi_reduction <add>, %63, %cst_37 [1] : vector<8x128xf32> to vector<8xf32>
    %65 = vector.shape_cast %64 : vector<8xf32> to vector<8x1xf32>
    %c0_38 = arith.constant 0 : index
    %c0_39 = arith.constant 0 : index
    %66 = vector.load %arg13[%c0_38, %c0_39] : memref<1x1xf32, #tpu.memory_space<vmem>>, vector<1x1xf32>
    %67 = vector.broadcast %66 : vector<1x1xf32> to vector<8x1xf32>
    %68 = arith.addf %65, %67 : vector<8x1xf32>
    %cst_40 = arith.constant 0.000000e+00 : f32
    %69 = vector.broadcast %cst_40 : f32 to vector<8x1xf32>
    %70 = arith.subf %69, %68 : vector<8x1xf32>
    %71 = math.exp %70 : vector<8x1xf32>
    %cst_41 = arith.constant 1.000000e+00 : f32
    %72 = vector.broadcast %cst_41 : f32 to vector<8x1xf32>
    %73 = arith.addf %72, %71 : vector<8x1xf32>
    %74 = tpu.reciprocal %73 {approx = true} : vector<8x1xf32> -> vector<8x1xf32>
    %c0_42 = arith.constant 0 : index
    %c0_43 = arith.constant 0 : index
    %75 = vector.load %arg14[%c0_42, %c0_43] : memref<8x1xf32, #tpu.memory_space<vmem>>, vector<8x1xf32>
    tpu.vector_store %arg14[%c0_42, %c0_43], %74 {strides = array<i32>} : memref<8x1xf32, #tpu.memory_space<vmem>>, vector<8x1xf32>,
    return
  }
  func.func @transform_0(%arg0: i32) -> (i32, i32) {
    %c0_i32 = arith.constant 0 : i32
    %c0_i32_0 = arith.constant 0 : i32
    return %arg0, %c0_i32 : i32, i32
  }
  func.func @transform_1(%arg0: i32) -> (i32, i32) {
    %c0_i32 = arith.constant 0 : i32
    %c0_i32_0 = arith.constant 0 : i32
    %c0_i32_1 = arith.constant 0 : i32
    return %c0_i32, %c0_i32_0 : i32, i32
  }
  func.func @transform_2(%arg0: i32) -> (i32, i32) {
    %c0_i32 = arith.constant 0 : i32
    %c0_i32_0 = arith.constant 0 : i32
    %c0_i32_1 = arith.constant 0 : i32
    return %c0_i32, %c0_i32_0 : i32, i32
  }
  func.func @transform_3(%arg0: i32) -> (i32, i32) {
    %c0_i32 = arith.constant 0 : i32
    %c0_i32_0 = arith.constant 0 : i32
    %c0_i32_1 = arith.constant 0 : i32
    return %c0_i32, %c0_i32_0 : i32, i32
  }
  func.func @transform_4(%arg0: i32) -> (i32, i32) {
    %c0_i32 = arith.constant 0 : i32
    %c0_i32_0 = arith.constant 0 : i32
    %c0_i32_1 = arith.constant 0 : i32
    return %c0_i32, %c0_i32_0 : i32, i32
  }
  func.func @transform_5(%arg0: i32) -> (i32, i32) {
    %c0_i32 = arith.constant 0 : i32
    %c0_i32_0 = arith.constant 0 : i32
    %c0_i32_1 = arith.constant 0 : i32
    return %c0_i32, %c0_i32_0 : i32, i32
  }
  func.func @transform_6(%arg0: i32) -> (i32, i32) {
    %c0_i32 = arith.constant 0 : i32
    %c0_i32_0 = arith.constant 0 : i32
    %c0_i32_1 = arith.constant 0 : i32
    return %c0_i32, %c0_i32_0 : i32, i32
  }
  func.func @transform_7(%arg0: i32) -> (i32, i32) {
    %c0_i32 = arith.constant 0 : i32
    %c0_i32_0 = arith.constant 0 : i32
    %c0_i32_1 = arith.constant 0 : i32
    return %c0_i32, %c0_i32_0 : i32, i32
  }
  func.func @transform_8(%arg0: i32) -> (i32, i32) {
    %c0_i32 = arith.constant 0 : i32
    %c0_i32_0 = arith.constant 0 : i32
    %c0_i32_1 = arith.constant 0 : i32
    return %c0_i32, %c0_i32_0 : i32, i32
  }
  func.func @transform_9(%arg0: i32) -> (i32, i32) {
    %c0_i32 = arith.constant 0 : i32
    %c0_i32_0 = arith.constant 0 : i32
    %c0_i32_1 = arith.constant 0 : i32
    return %c0_i32, %c0_i32_0 : i32, i32
  }
  func.func @transform_10(%arg0: i32) -> (i32, i32) {
    %c0_i32 = arith.constant 0 : i32
    %c0_i32_0 = arith.constant 0 : i32
    %c0_i32_1 = arith.constant 0 : i32
    return %c0_i32, %c0_i32_0 : i32, i32
  }
  func.func @transform_11(%arg0: i32) -> (i32, i32) {
    %c0_i32 = arith.constant 0 : i32
    %c0_i32_0 = arith.constant 0 : i32
    %c0_i32_1 = arith.constant 0 : i32
    return %c0_i32, %c0_i32_0 : i32, i32
  }
  func.func @transform_12(%arg0: i32) -> (i32, i32) {
    %c0_i32 = arith.constant 0 : i32
    %c0_i32_0 = arith.constant 0 : i32
    %c0_i32_1 = arith.constant 0 : i32
    return %c0_i32, %c0_i32_0 : i32, i32
  }
  func.func @transform_13(%arg0: i32) -> (i32, i32) {
    %c0_i32 = arith.constant 0 : i32
    %c0_i32_0 = arith.constant 0 : i32
    return %arg0, %c0_i32 : i32, i32
  }
}

</mosaic_0001>

<llo_original>
// kernel: tpu_custom_call.1
$region0: #{tpu_custom_call.1}
  #allocation0 [shape = 'u32[]', space=smem, size = 0x4, offset = 0x4, fixed_abs, tag = 'smem constant byte address 0x4 - core index']
  #allocation1 [shape = 'u32[144,128]{1,0:T(1,128)}', space=vmem, size = 0x12000, scoped, tag = 'internal scratch']
  #allocation2 [shape = 'f32[1,1]{1,0:T(1,128)S(1)}', space=vmem, size = 0x200, scoped, tag = 'scoped memory for tpu_custom_call.1']
  %s0 = inlined_call_operand.hbm [shape: f32[8,128], index: 0, kind: input, shape index: {}]
  %s1 = inlined_call_operand.hbm [shape: bf16[128,128], index: 1, kind: input, shape index: {}]
  %s2 = inlined_call_operand.vmem [shape: f32[1,128], index: 2, kind: input, shape index: {}]
  %s3 = inlined_call_operand.hbm [shape: bf16[128,256], index: 3, kind: input, shape index: {}]
  %s4 = inlined_call_operand.vmem [shape: f32[1,256], index: 4, kind: input, shape index: {}]
  %s5 = inlined_call_operand.hbm [shape: bf16[256,256], index: 5, kind: input, shape index: {}]
  %s6 = inlined_call_operand.vmem [shape: f32[1,256], index: 6, kind: input, shape index: {}]
  %s7 = inlined_call_operand.hbm [shape: bf16[256,128], index: 7, kind: input, shape index: {}]
  %s8 = inlined_call_operand.vmem [shape: f32[1,128], index: 8, kind: input, shape index: {}]
  %s9 = inlined_call_operand.hbm [shape: bf16[128,128], index: 9, kind: input, shape index: {}]
  %s10 = inlined_call_operand.vmem [shape: f32[1,128], index: 10, kind: input, shape index: {}]
  %s11 = inlined_call_operand.vmem [shape: f32[1,128], index: 11, kind: input, shape index: {}]
  %s12 = inlined_call_operand.<no memory space> [shape: f32[1,1], index: 12, kind: input, shape index: {}]
  %s13 = inlined_call_operand.vmem [shape: f32[8,1], index: 13, kind: output, shape index: {}]
  %s14 = sld [smem:[#allocation0]]
  $region86: #{tpu_custom_call.1} parent=0
    _
  %s16 = ssub.s32 1, %s14
  %s17 = scalar_select 0, %s16, %s14
  %v18 = vstv %s12
  %19 = vst [vmem:[#allocation2] sm:$0x1] %v18
  $region1: #{tpu_custom_call.1} parent=0
    #allocation3 [shape = 'u8[4096]{0}', space=vmem, size = 0x1000, scoped, tag = 'input window, operand 0, single buffered']
    #allocation4 [shape = 's32[1]{0}', space=sflag, size = 0x4, scoped, tag = 'scoped memory for tpu_custom_call.1']
    #allocation5 [shape = 'u8[32768]{0}', space=vmem, size = 0x8000, scoped, tag = 'input window, operand 1, single buffered']
    #allocation6 [shape = 's32[1]{0}', space=sflag, size = 0x4, scoped, tag = 'scoped memory for tpu_custom_call.1']
    #allocation7 [shape = 'u8[65536]{0}', space=vmem, size = 0x10000, scoped, tag = 'input window, operand 3, single buffered']
    #allocation8 [shape = 'u8[131072]{0}', space=vmem, size = 0x20000, scoped, tag = 'input window, operand 5, single buffered']
    #allocation9 [shape = 's32[1]{0}', space=sflag, size = 0x4, scoped, tag = 'scoped memory for tpu_custom_call.1']
    #allocation10 [shape = 'u8[65536]{0}', space=vmem, size = 0x10000, scoped, tag = 'input window, operand 7, single buffered']
    #allocation11 [shape = 'u8[32768]{0}', space=vmem, size = 0x8000, scoped, tag = 'input window, operand 9, single buffered']
    #allocation12 [shape = 's32[1]{0}', space=sflag, size = 0x4, scoped, tag = 'scoped memory for tpu_custom_call.1']
    %20 = vsyncpa [#allocation4], 0
    %21 = vsyncpa [#allocation6], 0
    %22 = vsyncpa [#allocation9], 0
    %23 = vsyncpa [#allocation12], 0
    // Predicated region
    $region2: #{tpu_custom_call.1} parent=1 // pred_check
      _
    $region3: #{tpu_custom_call.1} parent=1 // pred_check_branch
      %25 = sbr.rel (0) target = $region5
    $region4: #{tpu_custom_call.1} parent=1 // pred_region
      %s27 = ssub.s32 128, 128
      %28 = vsyncadd [#allocation4], %s27
      %s30 = sshll.u32 [#allocation3], 4
      %s31 = int_to_ptr.vmem [resolvable:$true] %s30
      %33 = dma.hbm_to_vmem [thread:$0]  %s0, 128, %s31, [#allocation4]
    $region5: #{tpu_custom_call.1} parent=1 // pred_fallthru
      _
    // Predicated region
    $region6: #{tpu_custom_call.1} parent=1 // pred_check
      _
    $region7: #{tpu_custom_call.1} parent=1 // pred_check_branch
      %35 = sbr.rel (0) target = $region9
    $region8: #{tpu_custom_call.1} parent=1 // pred_region
      %s37 = ssub.s32 1024, 1024
      %38 = vsyncadd [#allocation6], %s37
      %s39 = sshll.u32 [#allocation5], 4
      %s40 = int_to_ptr.vmem [resolvable:$true] %s39
      %45 = dma.hbm_to_vmem [thread:$0]  %s1, 1024, %s40, [#allocation6], 64, 64, 4
    $region9: #{tpu_custom_call.1} parent=1 // pred_fallthru
      _
    // Predicated region
    $region10: #{tpu_custom_call.1} parent=1 // pred_check
      _
    $region11: #{tpu_custom_call.1} parent=1 // pred_check_branch
      %47 = sbr.rel (0) target = $region13
    $region12: #{tpu_custom_call.1} parent=1 // pred_region
      _
    $region13: #{tpu_custom_call.1} parent=1 // pred_fallthru
      _
    // Predicated region
    $region14: #{tpu_custom_call.1} parent=1 // pred_check
      _
    $region15: #{tpu_custom_call.1} parent=1 // pred_check_branch
      %49 = sbr.rel (0) target = $region17
    $region16: #{tpu_custom_call.1} parent=1 // pred_region
      %s51 = ssub.s32 2048, 2048
      %52 = vsyncadd [#allocation6], %s51
      %s53 = sshll.u32 [#allocation7], 4
      %s54 = int_to_ptr.vmem [resolvable:$true] %s53
      %59 = dma.hbm_to_vmem [thread:$0]  %s3, 2048, %s54, [#allocation6], 128, 128, 8
    $region17: #{tpu_custom_call.1} parent=1 // pred_fallthru
      _
    // Predicated region
    $region18: #{tpu_custom_call.1} parent=1 // pred_check
      _
    $region19: #{tpu_custom_call.1} parent=1 // pred_check_branch
      %61 = sbr.rel (0) target = $region21
    $region20: #{tpu_custom_call.1} parent=1 // pred_region
      _
    $region21: #{tpu_custom_call.1} parent=1 // pred_fallthru
      _
    // Predicated region
    $region22: #{tpu_custom_call.1} parent=1 // pred_check
      _
    $region23: #{tpu_custom_call.1} parent=1 // pred_check_branch
      %63 = sbr.rel (0) target = $region25
    $region24: #{tpu_custom_call.1} parent=1 // pred_region
      %s65 = ssub.s32 4096, 4096
      %66 = vsyncadd [#allocation9], %s65
      %s67 = sshll.u32 [#allocation8], 4
      %s68 = int_to_ptr.vmem [resolvable:$true] %s67
      %73 = dma.hbm_to_vmem [thread:$0]  %s5, 4096, %s68, [#allocation9], 128, 128, 8
    $region25: #{tpu_custom_call.1} parent=1 // pred_fallthru
      _
    // Predicated region
    $region26: #{tpu_custom_call.1} parent=1 // pred_check
      _
    $region27: #{tpu_custom_call.1} parent=1 // pred_check_branch
      %75 = sbr.rel (0) target = $region29
    $region28: #{tpu_custom_call.1} parent=1 // pred_region
      _
    $region29: #{tpu_custom_call.1} parent=1 // pred_fallthru
      _
    // Predicated region
    $region30: #{tpu_custom_call.1} parent=1 // pred_check
      _
    $region31: #{tpu_custom_call.1} parent=1 // pred_check_branch
      %77 = sbr.rel (0) target = $region33
    $region32: #{tpu_custom_call.1} parent=1 // pred_region
      %s79 = ssub.s32 2048, 2048
      %80 = vsyncadd [#allocation9], %s79
      %s81 = sshll.u32 [#allocation10], 4
      %s82 = int_to_ptr.vmem [resolvable:$true] %s81
      %87 = dma.hbm_to_vmem [thread:$0]  %s7, 2048, %s82, [#allocation9], 64, 64, 4
    $region33: #{tpu_custom_call.1} parent=1 // pred_fallthru
      _
    // Predicated region
    $region34: #{tpu_custom_call.1} parent=1 // pred_check
      _
    $region35: #{tpu_custom_call.1} parent=1 // pred_check_branch
      %89 = sbr.rel (0) target = $region37
    $region36: #{tpu_custom_call.1} parent=1 // pred_region
      _
    $region37: #{tpu_custom_call.1} parent=1 // pred_fallthru
      _
    // Predicated region
    $region38: #{tpu_custom_call.1} parent=1 // pred_check
      _
    $region39: #{tpu_custom_call.1} parent=1 // pred_check_branch
      %91 = sbr.rel (0) target = $region41
    $region40: #{tpu_custom_call.1} parent=1 // pred_region
      %s93 = ssub.s32 1024, 1024
      %94 = vsyncadd [#allocation12], %s93
      %s95 = sshll.u32 [#allocation11], 4
      %s96 = int_to_ptr.vmem [resolvable:$true] %s95
      %101 = dma.hbm_to_vmem [thread:$0]  %s9, 1024, %s96, [#allocation12], 64, 64, 4
    $region41: #{tpu_custom_call.1} parent=1 // pred_fallthru
      _
    // Predicated region
    $region42: #{tpu_custom_call.1} parent=1 // pred_check
      _
    $region43: #{tpu_custom_call.1} parent=1 // pred_check_branch
      %103 = sbr.rel (0) target = $region45
    $region44: #{tpu_custom_call.1} parent=1 // pred_region
      _
    $region45: #{tpu_custom_call.1} parent=1 // pred_fallthru
      _
    // Predicated region
    $region46: #{tpu_custom_call.1} parent=1 // pred_check
      _
    $region47: #{tpu_custom_call.1} parent=1 // pred_check_branch
      %105 = sbr.rel (0) target = $region49
    $region48: #{tpu_custom_call.1} parent=1 // pred_region
      _
    $region49: #{tpu_custom_call.1} parent=1 // pred_fallthru
      _
    // Predicated region
    $region50: #{tpu_custom_call.1} parent=1 // pred_check
      _
    $region51: #{tpu_custom_call.1} parent=1 // pred_check_branch
      %107 = sbr.rel (0) target = $region53
    $region52: #{tpu_custom_call.1} parent=1 // pred_region
      _
    $region53: #{tpu_custom_call.1} parent=1 // pred_fallthru
      _
    // Predicated region
    $region54: #{tpu_custom_call.1} parent=1 // pred_check
      _
    $region55: #{tpu_custom_call.1} parent=1 // pred_check_branch
      %109 = sbr.rel (0) target = $region57
    $region56: #{tpu_custom_call.1} parent=1 // pred_region
      %110 = dma.done [#allocation4], 128
    $region57: #{tpu_custom_call.1} parent=1 // pred_fallthru
      _
    // Predicated region
    $region58: #{tpu_custom_call.1} parent=1 // pred_check
      _
    $region59: #{tpu_custom_call.1} parent=1 // pred_check_branch
      %112 = sbr.rel (0) target = $region61
    $region60: #{tpu_custom_call.1} parent=1 // pred_region
      %113 = dma.done [#allocation6], 1024
    $region61: #{tpu_custom_call.1} parent=1 // pred_fallthru
      _
    // Predicated region
    $region62: #{tpu_custom_call.1} parent=1 // pred_check
      _
    $region63: #{tpu_custom_call.1} parent=1 // pred_check_branch
      %115 = sbr.rel (0) target = $region65
    $region64: #{tpu_custom_call.1} parent=1 // pred_region
      %116 = dma.done [#allocation6], 2048
    $region65: #{tpu_custom_call.1} parent=1 // pred_fallthru
      _
    // Predicated region
    $region66: #{tpu_custom_call.1} parent=1 // pred_check
      _
    $region67: #{tpu_custom_call.1} parent=1 // pred_check_branch
      %118 = sbr.rel (0) target = $region69
    $region68: #{tpu_custom_call.1} parent=1 // pred_region
      %119 = dma.done [#allocation9], 4096
    $region69: #{tpu_custom_call.1} parent=1 // pred_fallthru
      _
    // Predicated region
    $region70: #{tpu_custom_call.1} parent=1 // pred_check
      _
    $region71: #{tpu_custom_call.1} parent=1 // pred_check_branch
      %121 = sbr.rel (0) target = $region73
    $region72: #{tpu_custom_call.1} parent=1 // pred_region
      %122 = dma.done [#allocation9], 2048
    $region73: #{tpu_custom_call.1} parent=1 // pred_fallthru
      _
    // Predicated region
    $region74: #{tpu_custom_call.1} parent=1 // pred_check
      _
    $region75: #{tpu_custom_call.1} parent=1 // pred_check_branch
      %124 = sbr.rel (0) target = $region77
    $region76: #{tpu_custom_call.1} parent=1 // pred_region
      %125 = dma.done [#allocation12], 1024
    $region77: #{tpu_custom_call.1} parent=1 // pred_fallthru
      _
    %v127 = vld [vmem:[#allocation3] sm:$0xff]
    %v128 = vpack.c.bf16 %v127, %v127
    %v129 = vld [vmem:[#allocation5] sm:$0xf]
    %v130 = vld [vmem:[#allocation5 + $0x4] sm:$0xf]
    %v131 = vld [vmem:[#allocation5 + $0x8] sm:$0xf]
    %v132 = vld [vmem:[#allocation5 + $0xc] sm:$0xf]
    %v133 = vld [vmem:[#allocation5 + $0x10] sm:$0xf]
    %v134 = vld [vmem:[#allocation5 + $0x14] sm:$0xf]
    %v135 = vld [vmem:[#allocation5 + $0x18] sm:$0xf]
    %v136 = vld [vmem:[#allocation5 + $0x1c] sm:$0xf]
    %v137 = vld [vmem:[#allocation5 + $0x20] sm:$0xf]
    %v138 = vld [vmem:[#allocation5 + $0x24] sm:$0xf]
    %v139 = vld [vmem:[#allocation5 + $0x28] sm:$0xf]
    %v140 = vld [vmem:[#allocation5 + $0x2c] sm:$0xf]
    %v141 = vld [vmem:[#allocation5 + $0x30] sm:$0xf]
    %v142 = vld [vmem:[#allocation5 + $0x34] sm:$0xf]
    %v143 = vld [vmem:[#allocation5 + $0x38] sm:$0xf]
    %v144 = vld [vmem:[#allocation5 + $0x3c] sm:$0xf]
    %v145 = vld [vmem:[%s2] sm:$0x1]
    %v147 = vlaneseq
    %v148 = vshrl.u32 %v147, 7
    %v149 = vsub.s32 0, %v148
    %v150 = vrot.slane %v145, %v149
    %v168 = vunpack.c.l.b16 %v129
    %v169 = vunpack.c.l.b16 %v130
    %v170 = vunpack.c.l.b16 %v131
    %v171 = vunpack.c.l.b16 %v132
    %v172 = vunpack.c.l.b16 %v133
    %v173 = vunpack.c.l.b16 %v134
    %v174 = vunpack.c.l.b16 %v135
    %v175 = vunpack.c.l.b16 %v136
    %v176 = vunpack.c.l.b16 %v137
    %v177 = vunpack.c.l.b16 %v138
    %v178 = vunpack.c.l.b16 %v139
    %v179 = vunpack.c.l.b16 %v140
    %v180 = vunpack.c.l.b16 %v141
    %v181 = vunpack.c.l.b16 %v142
    %v182 = vunpack.c.l.b16 %v143
    %v183 = vunpack.c.l.b16 %v144
    %v184 = vpack.c.b16 %v169, %v168
    %v185 = vpack.c.b16 %v171, %v170
    %v186 = vpack.c.b16 %v173, %v172
    %v187 = vpack.c.b16 %v175, %v174
    %v188 = vpack.c.b16 %v177, %v176
    %v189 = vpack.c.b16 %v179, %v178
    %v190 = vpack.c.b16 %v181, %v180
    %v191 = vpack.c.b16 %v183, %v182
    %200 = vmatprep.subr.bf16.mxu0 0
    %201 = vmatpush1.bf16.msra.mxu0 %v191
    %202 = vmatprep.subr.bf16.mxu0 0
    %203 = vmatpush1.bf16.msra.mxu0 %v190
    %204 = vmatprep.subr.bf16.mxu0 0
    %205 = vmatpush1.bf16.msra.mxu0 %v189
    %206 = vmatprep.subr.bf16.mxu0 0
    %207 = vmatpush1.bf16.msra.mxu0 %v188
    %208 = vmatprep.subr.bf16.mxu0 0
    %209 = vmatpush1.bf16.msra.mxu0 %v187
    %210 = vmatprep.subr.bf16.mxu0 0
    %211 = vmatpush1.bf16.msra.mxu0 %v186
    %212 = vmatprep.subr.bf16.mxu0 0
    %213 = vmatpush1.bf16.msra.mxu0 %v185
    %214 = vmatprep.subr.bf16.mxu0 0
    %215 = vmatpush1.bf16.msra.mxu0 %v184
    %216 = vmatprep.subr.bf16.mxu0 0
    %217 = vmatpush2.bf16.msra.mxu0 0
    %218 = vmatprep.subr.bf16.mxu0 0
    %219 = vmatpush2.bf16.msra.mxu0 0
    %220 = vmatprep.subr.bf16.mxu0 0
    %221 = vmatpush2.bf16.msra.mxu0 0
    %222 = vmatprep.subr.bf16.mxu0 0
    %223 = vmatpush2.bf16.msra.mxu0 0
    %224 = vmatprep.subr.bf16.mxu0 0
    %225 = vmatpush2.bf16.msra.mxu0 0
    %226 = vmatprep.subr.bf16.mxu0 0
    %227 = vmatpush2.bf16.msra.mxu0 0
    %228 = vmatprep.subr.bf16.mxu0 0
    %229 = vmatpush2.bf16.msra.mxu0 0
    %230 = vmatprep.subr.bf16.mxu0 0
    %231 = vmatpush2.bf16.msra.mxu0 0
    %232 = vmatprep.mubr.bf16.mxu0 0
    %233 = vmatmul.mubr.bf16.gmra.mxu0 %v128
    %v234 = vpop.f32.mrf.mxu0
    %v235 = vadd.f32 %v150, %v234
    %v236 = vpop.f32.mrf.mxu0
    %v237 = vpop.f32.mrf.mxu0
    %v238 = vpop.f32.mrf.mxu0
    %239 = vdwg.mxu0
    %v240 = vsub.f32 0.0, %v235
    %v241 = vmul.f32 %v240, 1.442695
    %v242 = vpow.pop %v241
    %v243 = vadd.f32 %v242, 1.0
    %v244 = vrcp.pop %v243
    %v245 = vpack.c.bf16 %v244, %v244
    %v246 = vld [vmem:[#allocation7] sm:$0xff]
    %v247 = vld [vmem:[#allocation7 + $0x8] sm:$0xff]
    %v248 = vld [vmem:[#allocation7 + $0x10] sm:$0xff]
    %v249 = vld [vmem:[#allocation7 + $0x18] sm:$0xff]
    %v250 = vld [vmem:[#allocation7 + $0x20] sm:$0xff]
    %v251 = vld [vmem:[#allocation7 + $0x28] sm:$0xff]
    %v252 = vld [vmem:[#allocation7 + $0x30] sm:$0xff]
    %v253 = vld [vmem:[#allocation7 + $0x38] sm:$0xff]
    %v254 = vld [vmem:[#allocation7 + $0x40] sm:$0xff]
    %v255 = vld [vmem:[#allocation7 + $0x48] sm:$0xff]
    %v256 = vld [vmem:[#allocation7 + $0x50] sm:$0xff]
    %v257 = vld [vmem:[#allocation7 + $0x58] sm:$0xff]
    %v258 = vld [vmem:[#allocation7 + $0x60] sm:$0xff]
    %v259 = vld [vmem:[#allocation7 + $0x68] sm:$0xff]
    %v260 = vld [vmem:[#allocation7 + $0x70] sm:$0xff]
    %v261 = vld [vmem:[#allocation7 + $0x78] sm:$0xff]
    %v262 = vld [vmem:[%s4] sm:$0x3]
    %v264 = vlaneseq
    %v265 = vshrl.u32 %v264, 7
    %v266 = vsub.s32 0, %v265
    %v267 = vrot.slane %v262, %v266
    %v268 = vlaneseq
    %v269 = vshrl.u32 %v268, 7
    %v270 = vsub.s32 1, %v269
    %v271 = vrot.slane %v262, %v270
    %v290 = vunpack.c.l.b16 %v246
    %v291 = vunpack.c.h.b16 %v246
    %v292 = vunpack.c.l.b16 %v247
    %v293 = vunpack.c.h.b16 %v247
    %v294 = vunpack.c.l.b16 %v248
    %v295 = vunpack.c.h.b16 %v248
    %v296 = vunpack.c.l.b16 %v249
    %v297 = vunpack.c.h.b16 %v249
    %v298 = vunpack.c.l.b16 %v250
    %v299 = vunpack.c.h.b16 %v250
    %v300 = vunpack.c.l.b16 %v251
    %v301 = vunpack.c.h.b16 %v251
    %v302 = vunpack.c.l.b16 %v252
    %v303 = vunpack.c.h.b16 %v252
    %v304 = vunpack.c.l.b16 %v253
    %v305 = vunpack.c.h.b16 %v253
    %v306 = vunpack.c.l.b16 %v254
    %v307 = vunpack.c.h.b16 %v254
    %v308 = vunpack.c.l.b16 %v255
    %v309 = vunpack.c.h.b16 %v255
    %v310 = vunpack.c.l.b16 %v256
    %v311 = vunpack.c.h.b16 %v256
    %v312 = vunpack.c.l.b16 %v257
    %v313 = vunpack.c.h.b16 %v257
    %v314 = vunpack.c.l.b16 %v258
    %v315 = vunpack.c.h.b16 %v258
    %v316 = vunpack.c.l.b16 %v259
    %v317 = vunpack.c.h.b16 %v259
    %v318 = vunpack.c.l.b16 %v260
    %v319 = vunpack.c.h.b16 %v260
    %v320 = vunpack.c.l.b16 %v261
    %v321 = vunpack.c.h.b16 %v261
    %v322 = vpack.c.b16 %v292, %v290
    %v323 = vpack.c.b16 %v293, %v291
    %v324 = vpack.c.b16 %v296, %v294
    %v325 = vpack.c.b16 %v297, %v295
    %v326 = vpack.c.b16 %v300, %v298
    %v327 = vpack.c.b16 %v301, %v299
    %v328 = vpack.c.b16 %v304, %v302
    %v329 = vpack.c.b16 %v305, %v303
    %v330 = vpack.c.b16 %v308, %v306
    %v331 = vpack.c.b16 %v309, %v307
    %v332 = vpack.c.b16 %v312, %v310
    %v333 = vpack.c.b16 %v313, %v311
    %v334 = vpack.c.b16 %v316, %v314
    %v335 = vpack.c.b16 %v317, %v315
    %v336 = vpack.c.b16 %v320, %v318
    %v337 = vpack.c.b16 %v321, %v319
    %354 = vmatprep.subr.bf16.mxu0 %v337
    %355 = vmatpush1.bf16.msra.mxu0 %v336
    %356 = vmatprep.subr.bf16.mxu0 %v335
    %357 = vmatpush1.bf16.msra.mxu0 %v334
    %358 = vmatprep.subr.bf16.mxu0 %v333
    %359 = vmatpush1.bf16.msra.mxu0 %v332
    %360 = vmatprep.subr.bf16.mxu0 %v331
    %361 = vmatpush1.bf16.msra.mxu0 %v330
    %362 = vmatprep.subr.bf16.mxu0 %v329
    %363 = vmatpush1.bf16.msra.mxu0 %v328
    %364 = vmatprep.subr.bf16.mxu0 %v327
    %365 = vmatpush1.bf16.msra.mxu0 %v326
    %366 = vmatprep.subr.bf16.mxu0 %v325
    %367 = vmatpush1.bf16.msra.mxu0 %v324
    %368 = vmatprep.subr.bf16.mxu0 %v323
    %369 = vmatpush1.bf16.msra.mxu0 %v322
    %370 = vmatprep.subr.bf16.mxu0 0
    %371 = vmatpush2.bf16.msra.mxu0 0
    %372 = vmatprep.subr.bf16.mxu0 0
    %373 = vmatpush2.bf16.msra.mxu0 0
    %374 = vmatprep.subr.bf16.mxu0 0
    %375 = vmatpush2.bf16.msra.mxu0 0
    %376 = vmatprep.subr.bf16.mxu0 0
    %377 = vmatpush2.bf16.msra.mxu0 0
    %378 = vmatprep.subr.bf16.mxu0 0
    %379 = vmatpush2.bf16.msra.mxu0 0
    %380 = vmatprep.subr.bf16.mxu0 0
    %381 = vmatpush2.bf16.msra.mxu0 0
    %382 = vmatprep.subr.bf16.mxu0 0
    %383 = vmatpush2.bf16.msra.mxu0 0
    %384 = vmatprep.subr.bf16.mxu0 0
    %385 = vmatpush2.bf16.msra.mxu0 0
    %386 = vmatprep.mubr.bf16.mxu0 0
    %387 = vmatmul.mubr.bf16.gmra.mxu0 %v245
    %v388 = vpop.f32.mrf.mxu0
    %v389 = vadd.f32 %v267, %v388
    %v390 = vpop.f32.mrf.mxu0
    %v391 = vadd.f32 %v271, %v390
    %v392 = vpop.f32.mrf.mxu0
    %v393 = vpop.f32.mrf.mxu0
    %394 = vdwg.mxu0
    %v395 = vsub.f32 0.0, %v389
    %v396 = vsub.f32 0.0, %v391
    %v397 = vmul.f32 %v395, 1.442695
    %v398 = vpow.pop %v397
    %v399 = vmul.f32 %v396, 1.442695
    %v400 = vpow.pop %v399
    %v401 = vadd.f32 %v398, 1.0
    %v402 = vadd.f32 %v400, 1.0
    %v403 = vrcp.pop %v401
    %v404 = vrcp.pop %v402
    %v405 = vpack.c.bf16 %v403, %v403
    %v406 = vpack.c.bf16 %v404, %v404
    %v407 = vld [vmem:[#allocation8] sm:$0xff]
    %v408 = vld [vmem:[#allocation8 + $0x8] sm:$0xff]
    %v409 = vld [vmem:[#allocation8 + $0x10] sm:$0xff]
    %v410 = vld [vmem:[#allocation8 + $0x18] sm:$0xff]
    %v411 = vld [vmem:[#allocation8 + $0x20] sm:$0xff]
    %v412 = vld [vmem:[#allocation8 + $0x28] sm:$0xff]
    %v413 = vld [vmem:[#allocation8 + $0x30] sm:$0xff]
    %v414 = vld [vmem:[#allocation8 + $0x38] sm:$0xff]
    %v415 = vld [vmem:[#allocation8 + $0x40] sm:$0xff]
    %v416 = vld [vmem:[#allocation8 + $0x48] sm:$0xff]
    %v417 = vld [vmem:[#allocation8 + $0x50] sm:$0xff]
    %v418 = vld [vmem:[#allocation8 + $0x58] sm:$0xff]
    %v419 = vld [vmem:[#allocation8 + $0x60] sm:$0xff]
    %v420 = vld [vmem:[#allocation8 + $0x68] sm:$0xff]
    %v421 = vld [vmem:[#allocation8 + $0x70] sm:$0xff]
    %v422 = vld [vmem:[#allocation8 + $0x78] sm:$0xff]
    %v423 = vld [vmem:[#allocation8 + $0x80] sm:$0xff]
    %v424 = vld [vmem:[#allocation8 + $0x88] sm:$0xff]
    %v425 = vld [vmem:[#allocation8 + $0x90] sm:$0xff]
    %v426 = vld [vmem:[#allocation8 + $0x98] sm:$0xff]
    %v427 = vld [vmem:[#allocation8 + $0xa0] sm:$0xff]
    %v428 = vld [vmem:[#allocation8 + $0xa8] sm:$0xff]
    %v429 = vld [vmem:[#allocation8 + $0xb0] sm:$0xff]
    %v430 = vld [vmem:[#allocation8 + $0xb8] sm:$0xff]
    %v431 = vld [vmem:[#allocation8 + $0xc0] sm:$0xff]
    %v432 = vld [vmem:[#allocation8 + $0xc8] sm:$0xff]
    %v433 = vld [vmem:[#allocation8 + $0xd0] sm:$0xff]
    %v434 = vld [vmem:[#allocation8 + $0xd8] sm:$0xff]
    %v435 = vld [vmem:[#allocation8 + $0xe0] sm:$0xff]
    %v436 = vld [vmem:[#allocation8 + $0xe8] sm:$0xff]
    %v437 = vld [vmem:[#allocation8 + $0xf0] sm:$0xff]
    %v438 = vld [vmem:[#allocation8 + $0xf8] sm:$0xff]
    %v439 = vld [vmem:[%s6] sm:$0x3]
    %v441 = vlaneseq
    %v442 = vshrl.u32 %v441, 7
    %v443 = vsub.s32 0, %v442
    %v444 = vrot.slane %v439, %v443
    %v445 = vlaneseq
    %v446 = vshrl.u32 %v445, 7
    %v447 = vsub.s32 1, %v446
    %v448 = vrot.slane %v439, %v447
    %v483 = vunpack.c.l.b16 %v407
    %v484 = vunpack.c.h.b16 %v407
    %v485 = vunpack.c.l.b16 %v408
    %v486 = vunpack.c.h.b16 %v408
    %v487 = vunpack.c.l.b16 %v409
    %v488 = vunpack.c.h.b16 %v409
    %v489 = vunpack.c.l.b16 %v410
    %v490 = vunpack.c.h.b16 %v410
    %v491 = vunpack.c.l.b16 %v411
    %v492 = vunpack.c.h.b16 %v411
    %v493 = vunpack.c.l.b16 %v412
    %v494 = vunpack.c.h.b16 %v412
    %v495 = vunpack.c.l.b16 %v413
    %v496 = vunpack.c.h.b16 %v413
    %v497 = vunpack.c.l.b16 %v414
    %v498 = vunpack.c.h.b16 %v414
    %v499 = vunpack.c.l.b16 %v415
    %v500 = vunpack.c.h.b16 %v415
    %v501 = vunpack.c.l.b16 %v416
    %v502 = vunpack.c.h.b16 %v416
    %v503 = vunpack.c.l.b16 %v417
    %v504 = vunpack.c.h.b16 %v417
    %v505 = vunpack.c.l.b16 %v418
    %v506 = vunpack.c.h.b16 %v418
    %v507 = vunpack.c.l.b16 %v419
    %v508 = vunpack.c.h.b16 %v419
    %v509 = vunpack.c.l.b16 %v420
    %v510 = vunpack.c.h.b16 %v420
    %v511 = vunpack.c.l.b16 %v421
    %v512 = vunpack.c.h.b16 %v421
    %v513 = vunpack.c.l.b16 %v422
    %v514 = vunpack.c.h.b16 %v422
    %v515 = vunpack.c.l.b16 %v423
    %v516 = vunpack.c.h.b16 %v423
    %v517 = vunpack.c.l.b16 %v424
    %v518 = vunpack.c.h.b16 %v424
    %v519 = vunpack.c.l.b16 %v425
    %v520 = vunpack.c.h.b16 %v425
    %v521 = vunpack.c.l.b16 %v426
    %v522 = vunpack.c.h.b16 %v426
    %v523 = vunpack.c.l.b16 %v427
    %v524 = vunpack.c.h.b16 %v427
    %v525 = vunpack.c.l.b16 %v428
    %v526 = vunpack.c.h.b16 %v428
    %v527 = vunpack.c.l.b16 %v429
    %v528 = vunpack.c.h.b16 %v429
    %v529 = vunpack.c.l.b16 %v430
    %v530 = vunpack.c.h.b16 %v430
    %v531 = vunpack.c.l.b16 %v431
    %v532 = vunpack.c.h.b16 %v431
    %v533 = vunpack.c.l.b16 %v432
    %v534 = vunpack.c.h.b16 %v432
    %v535 = vunpack.c.l.b16 %v433
    %v536 = vunpack.c.h.b16 %v433
    %v537 = vunpack.c.l.b16 %v434
    %v538 = vunpack.c.h.b16 %v434
    %v539 = vunpack.c.l.b16 %v435
    %v540 = vunpack.c.h.b16 %v435
    %v541 = vunpack.c.l.b16 %v436
    %v542 = vunpack.c.h.b16 %v436
    %v543 = vunpack.c.l.b16 %v437
    %v544 = vunpack.c.h.b16 %v437
    %v545 = vunpack.c.l.b16 %v438
    %v546 = vunpack.c.h.b16 %v438
    %v547 = vpack.c.b16 %v485, %v483
    %v548 = vpack.c.b16 %v486, %v484
    %v549 = vpack.c.b16 %v489, %v487
    %v550 = vpack.c.b16 %v490, %v488
    %v551 = vpack.c.b16 %v493, %v491
    %v552 = vpack.c.b16 %v494, %v492
    %v553 = vpack.c.b16 %v497, %v495
    %v554 = vpack.c.b16 %v498, %v496
    %v555 = vpack.c.b16 %v501, %v499
    %v556 = vpack.c.b16 %v502, %v500
    %v557 = vpack.c.b16 %v505, %v503
    %v558 = vpack.c.b16 %v506, %v504
    %v559 = vpack.c.b16 %v509, %v507
    %v560 = vpack.c.b16 %v510, %v508
    %v561 = vpack.c.b16 %v513, %v511
    %v562 = vpack.c.b16 %v514, %v512
    %v563 = vpack.c.b16 %v517, %v515
    %v564 = vpack.c.b16 %v518, %v516
    %v565 = vpack.c.b16 %v521, %v519
    %v566 = vpack.c.b16 %v522, %v520
    %v567 = vpack.c.b16 %v525, %v523
    %v568 = vpack.c.b16 %v526, %v524
    %v569 = vpack.c.b16 %v529, %v527
    %v570 = vpack.c.b16 %v530, %v528
    %v571 = vpack.c.b16 %v533, %v531
    %v572 = vpack.c.b16 %v534, %v532
    %v573 = vpack.c.b16 %v537, %v535
    %v574 = vpack.c.b16 %v538, %v536
    %v575 = vpack.c.b16 %v541, %v539
    %v576 = vpack.c.b16 %v542, %v540
    %v577 = vpack.c.b16 %v545, %v543
    %v578 = vpack.c.b16 %v546, %v544
    %611 = vmatprep.subr.bf16.mxu0 %v562
    %612 = vmatpush1.bf16.msra.mxu0 %v561
    %613 = vmatprep.subr.bf16.mxu0 %v560
    %614 = vmatpush1.bf16.msra.mxu0 %v559
    %615 = vmatprep.subr.bf16.mxu0 %v558
    %616 = vmatpush1.bf16.msra.mxu0 %v557
    %617 = vmatprep.subr.bf16.mxu0 %v556
    %618 = vmatpush1.bf16.msra.mxu0 %v555
    %619 = vmatprep.subr.bf16.mxu0 %v554
    %620 = vmatpush1.bf16.msra.mxu0 %v553
    %621 = vmatprep.subr.bf16.mxu0 %v552
    %622 = vmatpush1.bf16.msra.mxu0 %v551
    %623 = vmatprep.subr.bf16.mxu0 %v550
    %624 = vmatpush1.bf16.msra.mxu0 %v549
    %625 = vmatprep.subr.bf16.mxu0 %v548
    %626 = vmatpush1.bf16.msra.mxu0 %v547
    %627 = vmatprep.subr.bf16.mxu0 %v578
    %628 = vmatpush2.bf16.msra.mxu0 %v577
    %629 = vmatprep.subr.bf16.mxu0 %v576
    %630 = vmatpush2.bf16.msra.mxu0 %v575
    %631 = vmatprep.subr.bf16.mxu0 %v574
    %632 = vmatpush2.bf16.msra.mxu0 %v573
    %633 = vmatprep.subr.bf16.mxu0 %v572
    %634 = vmatpush2.bf16.msra.mxu0 %v571
    %635 = vmatprep.subr.bf16.mxu0 %v570
    %636 = vmatpush2.bf16.msra.mxu0 %v569
    %637 = vmatprep.subr.bf16.mxu0 %v568
    %638 = vmatpush2.bf16.msra.mxu0 %v567
    %639 = vmatprep.subr.bf16.mxu0 %v566
    %640 = vmatpush2.bf16.msra.mxu0 %v565
    %641 = vmatprep.subr.bf16.mxu0 %v564
    %642 = vmatpush2.bf16.msra.mxu0 %v563
    %643 = vmatprep.mubr.bf16.mxu0 %v406
    %644 = vmatmul.mubr.bf16.gmra.mxu0 %v405
    %v645 = vpop.f32.mrf.mxu0
    %v646 = vadd.f32 %v444, %v645
    %v647 = vpop.f32.mrf.mxu0
    %v648 = vadd.f32 %v448, %v647
    %v649 = vpop.f32.mrf.mxu0
    %v650 = vpop.f32.mrf.mxu0
    %651 = vdwg.mxu0
    %v652 = vsub.f32 0.0, %v646
    %v653 = vsub.f32 0.0, %v648
    %v654 = vmul.f32 %v652, 1.442695
    %v655 = vpow.pop %v654
    %v656 = vmul.f32 %v653, 1.442695
    %v657 = vpow.pop %v656
    %v658 = vadd.f32 %v655, 1.0
    %v659 = vadd.f32 %v657, 1.0
    %v660 = vrcp.pop %v658
    %v661 = vrcp.pop %v659
    %v662 = vpack.c.bf16 %v660, %v660
    %v663 = vpack.c.bf16 %v661, %v661
    %v664 = vld [vmem:[#allocation10] sm:$0xf]
    %v665 = vld [vmem:[#allocation10 + $0x4] sm:$0xf]
    %v666 = vld [vmem:[#allocation10 + $0x8] sm:$0xf]
    %v667 = vld [vmem:[#allocation10 + $0xc] sm:$0xf]
    %v668 = vld [vmem:[#allocation10 + $0x10] sm:$0xf]
    %v669 = vld [vmem:[#allocation10 + $0x14] sm:$0xf]
    %v670 = vld [vmem:[#allocation10 + $0x18] sm:$0xf]
    %v671 = vld [vmem:[#allocation10 + $0x1c] sm:$0xf]
    %v672 = vld [vmem:[#allocation10 + $0x20] sm:$0xf]
    %v673 = vld [vmem:[#allocation10 + $0x24] sm:$0xf]
    %v674 = vld [vmem:[#allocation10 + $0x28] sm:$0xf]
    %v675 = vld [vmem:[#allocation10 + $0x2c] sm:$0xf]
    %v676 = vld [vmem:[#allocation10 + $0x30] sm:$0xf]
    %v677 = vld [vmem:[#allocation10 + $0x34] sm:$0xf]
    %v678 = vld [vmem:[#allocation10 + $0x38] sm:$0xf]
    %v679 = vld [vmem:[#allocation10 + $0x3c] sm:$0xf]
    %v680 = vld [vmem:[#allocation10 + $0x40] sm:$0xf]
    %v681 = vld [vmem:[#allocation10 + $0x44] sm:$0xf]
    %v682 = vld [vmem:[#allocation10 + $0x48] sm:$0xf]
    %v683 = vld [vmem:[#allocation10 + $0x4c] sm:$0xf]
    %v684 = vld [vmem:[#allocation10 + $0x50] sm:$0xf]
    %v685 = vld [vmem:[#allocation10 + $0x54] sm:$0xf]
    %v686 = vld [vmem:[#allocation10 + $0x58] sm:$0xf]
    %v687 = vld [vmem:[#allocation10 + $0x5c] sm:$0xf]
    %v688 = vld [vmem:[#allocation10 + $0x60] sm:$0xf]
    %v689 = vld [vmem:[#allocation10 + $0x64] sm:$0xf]
    %v690 = vld [vmem:[#allocation10 + $0x68] sm:$0xf]
    %v691 = vld [vmem:[#allocation10 + $0x6c] sm:$0xf]
    %v692 = vld [vmem:[#allocation10 + $0x70] sm:$0xf]
    %v693 = vld [vmem:[#allocation10 + $0x74] sm:$0xf]
    %v694 = vld [vmem:[#allocation10 + $0x78] sm:$0xf]
    %v695 = vld [vmem:[#allocation10 + $0x7c] sm:$0xf]
    %v696 = vld [vmem:[%s8] sm:$0x1]
    %v698 = vlaneseq
    %v699 = vshrl.u32 %v698, 7
    %v700 = vsub.s32 0, %v699
    %v701 = vrot.slane %v696, %v700
    %v735 = vunpack.c.l.b16 %v664
    %v736 = vunpack.c.l.b16 %v665
    %v737 = vunpack.c.l.b16 %v666
    %v738 = vunpack.c.l.b16 %v667
    %v739 = vunpack.c.l.b16 %v668
    %v740 = vunpack.c.l.b16 %v669
    %v741 = vunpack.c.l.b16 %v670
    %v742 = vunpack.c.l.b16 %v671
    %v743 = vunpack.c.l.b16 %v672
    %v744 = vunpack.c.l.b16 %v673
    %v745 = vunpack.c.l.b16 %v674
    %v746 = vunpack.c.l.b16 %v675
    %v747 = vunpack.c.l.b16 %v676
    %v748 = vunpack.c.l.b16 %v677
    %v749 = vunpack.c.l.b16 %v678
    %v750 = vunpack.c.l.b16 %v679
    %v751 = vunpack.c.l.b16 %v680
    %v752 = vunpack.c.l.b16 %v681
    %v753 = vunpack.c.l.b16 %v682
    %v754 = vunpack.c.l.b16 %v683
    %v755 = vunpack.c.l.b16 %v684
    %v756 = vunpack.c.l.b16 %v685
    %v757 = vunpack.c.l.b16 %v686
    %v758 = vunpack.c.l.b16 %v687
    %v759 = vunpack.c.l.b16 %v688
    %v760 = vunpack.c.l.b16 %v689
    %v761 = vunpack.c.l.b16 %v690
    %v762 = vunpack.c.l.b16 %v691
    %v763 = vunpack.c.l.b16 %v692
    %v764 = vunpack.c.l.b16 %v693
    %v765 = vunpack.c.l.b16 %v694
    %v766 = vunpack.c.l.b16 %v695
    %v767 = vpack.c.b16 %v736, %v735
    %v768 = vpack.c.b16 %v738, %v737
    %v769 = vpack.c.b16 %v740, %v739
    %v770 = vpack.c.b16 %v742, %v741
    %v771 = vpack.c.b16 %v744, %v743
    %v772 = vpack.c.b16 %v746, %v745
    %v773 = vpack.c.b16 %v748, %v747
    %v774 = vpack.c.b16 %v750, %v749
    %v775 = vpack.c.b16 %v752, %v751
    %v776 = vpack.c.b16 %v754, %v753
    %v777 = vpack.c.b16 %v756, %v755
    %v778 = vpack.c.b16 %v758, %v757
    %v779 = vpack.c.b16 %v760, %v759
    %v780 = vpack.c.b16 %v762, %v761
    %v781 = vpack.c.b16 %v764, %v763
    %v782 = vpack.c.b16 %v766, %v765
    %799 = vmatprep.subr.bf16.mxu0 0
    %800 = vmatpush1.bf16.msra.mxu0 %v774
    %801 = vmatprep.subr.bf16.mxu0 0
    %802 = vmatpush1.bf16.msra.mxu0 %v773
    %803 = vmatprep.subr.bf16.mxu0 0
    %804 = vmatpush1.bf16.msra.mxu0 %v772
    %805 = vmatprep.subr.bf16.mxu0 0
    %806 = vmatpush1.bf16.msra.mxu0 %v771
    %807 = vmatprep.subr.bf16.mxu0 0
    %808 = vmatpush1.bf16.msra.mxu0 %v770
    %809 = vmatprep.subr.bf16.mxu0 0
    %810 = vmatpush1.bf16.msra.mxu0 %v769
    %811 = vmatprep.subr.bf16.mxu0 0
    %812 = vmatpush1.bf16.msra.mxu0 %v768
    %813 = vmatprep.subr.bf16.mxu0 0
    %814 = vmatpush1.bf16.msra.mxu0 %v767
    %815 = vmatprep.subr.bf16.mxu0 0
    %816 = vmatpush2.bf16.msra.mxu0 %v782
    %817 = vmatprep.subr.bf16.mxu0 0
    %818 = vmatpush2.bf16.msra.mxu0 %v781
    %819 = vmatprep.subr.bf16.mxu0 0
    %820 = vmatpush2.bf16.msra.mxu0 %v780
    %821 = vmatprep.subr.bf16.mxu0 0
    %822 = vmatpush2.bf16.msra.mxu0 %v779
    %823 = vmatprep.subr.bf16.mxu0 0
    %824 = vmatpush2.bf16.msra.mxu0 %v778
    %825 = vmatprep.subr.bf16.mxu0 0
    %826 = vmatpush2.bf16.msra.mxu0 %v777
    %827 = vmatprep.subr.bf16.mxu0 0
    %828 = vmatpush2.bf16.msra.mxu0 %v776
    %829 = vmatprep.subr.bf16.mxu0 0
    %830 = vmatpush2.bf16.msra.mxu0 %v775
    %831 = vmatprep.mubr.bf16.mxu0 %v663
    %832 = vmatmul.mubr.bf16.gmra.mxu0 %v662
    %v833 = vpop.f32.mrf.mxu0
    %v834 = vadd.f32 %v701, %v833
    %v835 = vpop.f32.mrf.mxu0
    %v836 = vpop.f32.mrf.mxu0
    %v837 = vpop.f32.mrf.mxu0
    %838 = vdwg.mxu0
    %v839 = vsub.f32 0.0, %v834
    %v840 = vmul.f32 %v839, 1.442695
    %v841 = vpow.pop %v840
    %v842 = vadd.f32 %v841, 1.0
    %v843 = vrcp.pop %v842
    %v844 = vpack.c.bf16 %v843, %v843
    %v845 = vld [vmem:[#allocation11] sm:$0xf]
    %v846 = vld [vmem:[#allocation11 + $0x4] sm:$0xf]
    %v847 = vld [vmem:[#allocation11 + $0x8] sm:$0xf]
    %v848 = vld [vmem:[#allocation11 + $0xc] sm:$0xf]
    %v849 = vld [vmem:[#allocation11 + $0x10] sm:$0xf]
    %v850 = vld [vmem:[#allocation11 + $0x14] sm:$0xf]
    %v851 = vld [vmem:[#allocation11 + $0x18] sm:$0xf]
    %v852 = vld [vmem:[#allocation11 + $0x1c] sm:$0xf]
    %v853 = vld [vmem:[#allocation11 + $0x20] sm:$0xf]
    %v854 = vld [vmem:[#allocation11 + $0x24] sm:$0xf]
    %v855 = vld [vmem:[#allocation11 + $0x28] sm:$0xf]
    %v856 = vld [vmem:[#allocation11 + $0x2c] sm:$0xf]
    %v857 = vld [vmem:[#allocation11 + $0x30] sm:$0xf]
    %v858 = vld [vmem:[#allocation11 + $0x34] sm:$0xf]
    %v859 = vld [vmem:[#allocation11 + $0x38] sm:$0xf]
    %v860 = vld [vmem:[#allocation11 + $0x3c] sm:$0xf]
    %v861 = vld [vmem:[%s10] sm:$0x1]
    %v863 = vlaneseq
    %v864 = vshrl.u32 %v863, 7
    %v865 = vsub.s32 0, %v864
    %v866 = vrot.slane %v861, %v865
    %v884 = vunpack.c.l.b16 %v845
    %v885 = vunpack.c.l.b16 %v846
    %v886 = vunpack.c.l.b16 %v847
    %v887 = vunpack.c.l.b16 %v848
    %v888 = vunpack.c.l.b16 %v849
    %v889 = vunpack.c.l.b16 %v850
    %v890 = vunpack.c.l.b16 %v851
    %v891 = vunpack.c.l.b16 %v852
    %v892 = vunpack.c.l.b16 %v853
    %v893 = vunpack.c.l.b16 %v854
    %v894 = vunpack.c.l.b16 %v855
    %v895 = vunpack.c.l.b16 %v856
    %v896 = vunpack.c.l.b16 %v857
    %v897 = vunpack.c.l.b16 %v858
    %v898 = vunpack.c.l.b16 %v859
    %v899 = vunpack.c.l.b16 %v860
    %v900 = vpack.c.b16 %v885, %v884
    %v901 = vpack.c.b16 %v887, %v886
    %v902 = vpack.c.b16 %v889, %v888
    %v903 = vpack.c.b16 %v891, %v890
    %v904 = vpack.c.b16 %v893, %v892
    %v905 = vpack.c.b16 %v895, %v894
    %v906 = vpack.c.b16 %v897, %v896
    %v907 = vpack.c.b16 %v899, %v898
    %916 = vmatprep.subr.bf16.mxu0 0
    %917 = vmatpush1.bf16.msra.mxu0 %v907
    %918 = vmatprep.subr.bf16.mxu0 0
    %919 = vmatpush1.bf16.msra.mxu0 %v906
    %920 = vmatprep.subr.bf16.mxu0 0
    %921 = vmatpush1.bf16.msra.mxu0 %v905
    %922 = vmatprep.subr.bf16.mxu0 0
    %923 = vmatpush1.bf16.msra.mxu0 %v904
    %924 = vmatprep.subr.bf16.mxu0 0
    %925 = vmatpush1.bf16.msra.mxu0 %v903
    %926 = vmatprep.subr.bf16.mxu0 0
    %927 = vmatpush1.bf16.msra.mxu0 %v902
    %928 = vmatprep.subr.bf16.mxu0 0
    %929 = vmatpush1.bf16.msra.mxu0 %v901
    %930 = vmatprep.subr.bf16.mxu0 0
    %931 = vmatpush1.bf16.msra.mxu0 %v900
    %932 = vmatprep.subr.bf16.mxu0 0
    %933 = vmatpush2.bf16.msra.mxu0 0
    %934 = vmatprep.subr.bf16.mxu0 0
    %935 = vmatpush2.bf16.msra.mxu0 0
    %936 = vmatprep.subr.bf16.mxu0 0
    %937 = vmatpush2.bf16.msra.mxu0 0
    %938 = vmatprep.subr.bf16.mxu0 0
    %939 = vmatpush2.bf16.msra.mxu0 0
    %940 = vmatprep.subr.bf16.mxu0 0
    %941 = vmatpush2.bf16.msra.mxu0 0
    %942 = vmatprep.subr.bf16.mxu0 0
    %943 = vmatpush2.bf16.msra.mxu0 0
    %944 = vmatprep.subr.bf16.mxu0 0
    %945 = vmatpush2.bf16.msra.mxu0 0
    %946 = vmatprep.subr.bf16.mxu0 0
    %947 = vmatpush2.bf16.msra.mxu0 0
    %948 = vmatprep.mubr.bf16.mxu0 0
    %949 = vmatmul.mubr.bf16.gmra.mxu0 %v844
    %v950 = vpop.f32.mrf.mxu0
    %v951 = vadd.f32 %v866, %v950
    %v952 = vpop.f32.mrf.mxu0
    %v953 = vpop.f32.mrf.mxu0
    %v954 = vpop.f32.mrf.mxu0
    %955 = vdwg.mxu0
    %v956 = vsub.f32 0.0, %v951
    %v957 = vmul.f32 %v956, 1.442695
    %v958 = vpow.pop %v957
    %v959 = vadd.f32 %v958, 1.0
    %v960 = vrcp.pop %v959
    %v961 = vld [vmem:[%s11] sm:$0x1]
    %v963 = vlaneseq
    %v964 = vshrl.u32 %v963, 7
    %v965 = vsub.s32 0, %v964
    %v966 = vrot.slane %v961, %v965
    %v968 = vmul.f32 %v960, %v966
    %969 = vadd.xlane.f32.xlu0 %v968
    %v970 = vpop.xlane.xlu0 %969
    %v971 = vld [vmem:[#allocation2] sm:$0x1]
    %v973 = vlaneseq
    %v974 = vshrl.u32 %v973, 7
    %v975 = vsub.s32 0, %v974
    %v976 = vrot.slane %v971, %v975
    %v978 = vadd.f32 %v970, %v976
    %v979 = vsub.f32 0.0, %v978
    %v980 = vmul.f32 %v979, 1.442695
    %v981 = vpow.pop %v980
    %v982 = vadd.f32 %v981, 1.0
    %v983 = vrcp.pop %v982
    %vm984 = vcmask 7168
    %985 = vst.msk [vmem:[%s13] sm:$0xff] %vm984, %v983
    // Predicated region
    $region78: #{tpu_custom_call.1} parent=1 // pred_check
      _
    $region79: #{tpu_custom_call.1} parent=1 // pred_check_branch
      %987 = sbr.rel (0) target = $region81
    $region80: #{tpu_custom_call.1} parent=1 // pred_region
      _
    $region81: #{tpu_custom_call.1} parent=1 // pred_fallthru
      _
    // Predicated region
    $region82: #{tpu_custom_call.1} parent=1 // pred_check
      _
    $region83: #{tpu_custom_call.1} parent=1 // pred_check_branch
      %989 = sbr.rel (0) target = $region85
    $region84: #{tpu_custom_call.1} parent=1 // pred_region
      _
    $region85: #{tpu_custom_call.1} parent=1 // pred_fallthru
      _
    %990 = vsyncpa [#allocation4], 1
    %991 = vsyncpa [#allocation6], 1
    %992 = vsyncpa [#allocation9], 1
    %993 = vsyncpa [#allocation12], 1

</llo_original>
